<compile_context>
chip_gen: v6e
topology: v6e:2x2x1
jax: 0.10.0
libtpu: 0.0.40
codegen_flags: <defaults>
</compile_context>

<pallas_src>
import functools

import jax
import jax.numpy as jnp
from jax import lax
from jax.experimental import pallas as pl
from jax.experimental.pallas import tpu as pltpu


# ----------------------------- helpers --------------------------------------


def _round_up(x, m):
    return ((x + m - 1) // m) * m


def _largest_tile_multiple_of_128(total, target):
    """Largest multiple of 128 that divides `total` and is <= max(target, 128)."""
    t = max(128, min(target, total))
    t = (t // 128) * 128
    while total % t != 0:   # total is a multiple of 128, so t == 128 terminates
        t -= 128
    return t


def _vmem_bytes(b_pad, in_dim, tn, tb, out_itemsize):
    x_res = 2 * b_pad * in_dim * 4       # resident f32 x (counted double-buffered)
    xn_scr = b_pad * in_dim * 2          # bf16 normalized-x scratch
    w_dbuf = 2 * tn * in_dim * 2         # bf16 weight tile, double-buffered
    o_dbuf = 2 * tb * tn * out_itemsize  # output tile, double-buffered
    return x_res + xn_scr + w_dbuf + o_dbuf


# ----------------------------- kernel ----------------------------------------


def _dino_head_kernel(x_ref, w_ref, o_ref, xn_ref, *, tb):
    """One (out-tile j, batch-tile b) step.

    x_ref : [B_pad, in_dim] f32  un-normalized activations (resident, DMA'd once)
    w_ref : [tn, in_dim]    bf16 pre-normalized weight rows (streamed from HBM)
    o_ref : [tb, tn]             logits tile
    xn_ref: [B_pad, in_dim] bf16 scratch: normalized x * 10 (temperature folded)
    """
    b = pl.program_id(1)

    # Hoisted out of the hot (batch) loop: normalize the whole batch once per
    # out-tile into the persistent VMEM scratch.  F.normalize(eps=1e-12) fused
    # with the 1/0.1 temperature:  x * 10 * rsqrt(max(sum(x^2), 1e-24)).
    @pl.when(b == 0)
    def _():
        xf = x_ref[...].astype(jnp.float32)
        inv = lax.rsqrt(
            jnp.maximum(jnp.sum(xf * xf, axis=-1, keepdims=True), 1e-24)
        ) * 10.0
        xn_ref[...] = (xf * inv).astype(jnp.bfloat16)

    xb = xn_ref[pl.ds(pl.multiple_of(b * tb, tb), tb), :]

    # MXU-native LHS x RHS^T: contract the last dim of both operands (no XLU
    # transpose), bf16 x bf16 with f32 accumulation.
    acc = lax.dot_general(
        xb,
        w_ref[...],
        dimension_numbers=(((1,), (1,)), ((), ())),
        preferred_element_type=jnp.float32,
    )
    o_ref[...] = acc.astype(o_ref.dtype)


# ----------------------------- wrapper ----------------------------------------


def prepare_dino_head_params(weight_v, weight_g=None):
    """One-time parameter prep (amortized across forward calls).

    Folds the weight_norm scale (g / ||V_row||; g == 1 in DINOHead since
    weight_g.data.fill_(1)) into the weight, casts to bf16 for HBM streaming
    (documented accuracy decision: ~0.4% relative weight error), and pads
    out_dim to a multiple of 128 so every tile is lane-dense (no masked stores).

    Returns (w_eff [out_pad, in_dim] bf16, out_dim int).
    """
    w32 = weight_v.astype(jnp.float32)
    scale = lax.rsqrt(jnp.sum(w32 * w32, axis=-1, keepdims=True))
    if weight_g is not None:  # norm_last_layer=False case: trainable g
        scale = scale * weight_g.reshape(-1, 1).astype(jnp.float32)
    w_eff = (w32 * scale).astype(jnp.bfloat16)
    out_dim = w_eff.shape[0]
    out_pad = _round_up(out_dim, 128)
    if out_pad != out_dim:
        w_eff = jnp.pad(w_eff, ((0, out_pad - out_dim), (0, 0)))
    return w_eff, out_dim


@functools.partial(
    jax.jit,
    static_argnames=("out_dim", "block_n", "out_dtype", "vmem_budget_bytes"),
)
def dino_head_forward(
    x,
    w_eff,
    *,
    out_dim=None,
    block_n=4096,
    out_dtype=jnp.float32,          # bf16 allowed if the consumer tolerates it
    vmem_budget_bytes=40 * 1024 * 1024,
):
    """x: [B, in_dim] (any float dtype), w_eff: [out_pad, in_dim] bf16 from prep."""
    B, in_dim = x.shape
    out_pad, in_dim_w = w_eff.shape
    assert in_dim == in_dim_w
    assert out_pad % 128 == 0, "use prepare_dino_head_params (pads out_dim to 128)"
    if out_dim is None:
        out_dim = out_pad
    assert 0 < out_dim <= out_pad

    out_itemsize = jnp.dtype(out_dtype).itemsize

    # --- tile selection under a VMEM budget (portable across v5e/v6e/v7x) ---
    tn = _largest_tile_multiple_of_128(out_pad, block_n)
    tb = min(_round_up(B, 8), 256)
    while _vmem_bytes(_round_up(B, tb), in_dim, tn, tb, out_itemsize) > vmem_budget_bytes:
        if tn > 128:
            tn = _largest_tile_multiple_of_128(out_pad, tn // 2)
        elif tb > 8:
            tb = max(8, ((tb // 2) // 8) * 8)
        else:
            break
    B_pad = _round_up(B, tb)

    if B_pad != B:
        # zero rows normalize to zero rows (0 * finite rsqrt) -> sliced away below
        x = jnp.pad(x, ((0, B_pad - B), (0, 0)))

    # Batch innermost: W block index is constant across it, so each W tile is
    # DMA'd exactly once while the f32 output double-buffer stays tb*tn.
    grid = (out_pad // tn, B_pad // tb)

    vmem_need = _vmem_bytes(B_pad, in_dim, tn, tb, out_itemsize)
    vmem_limit = min(max(int(vmem_need * 1.25) + (4 << 20), 32 << 20), 56 << 20)

    kernel = functools.partial(_dino_head_kernel, tb=tb)

    out = pl.pallas_call(
        kernel,
        out_shape=jax.ShapeDtypeStruct((B_pad, out_pad), out_dtype),
        grid_spec=pltpu.PrefetchScalarGridSpec(
            num_scalar_prefetch=0,
            grid=grid,
            in_specs=[
                # x: resident full-batch block, DMA'd once.
                pl.BlockSpec((B_pad, in_dim), lambda j, b: (0, 0)),
                # W: streamed out_dim tiles (double-buffered by the pipeline),
                # index independent of the inner batch axis.
                pl.BlockSpec((tn, in_dim), lambda j, b: (j, 0)),
            ],
            out_specs=pl.BlockSpec((tb, tn), lambda j, b: (b, j)),
            scratch_shapes=[pltpu.VMEM((B_pad, in_dim), jnp.bfloat16)],
        ),
        compiler_params=pltpu.CompilerParams(
            # out-tiles are independent -> shard across TensorCores on v7x;
            # batch axis is sequential (scratch init at b == 0 must run first).
            dimension_semantics=("parallel", "arbitrary"),
            vmem_limit_bytes=vmem_limit,
        ),
        cost_estimate=pl.CostEstimate(
            flops=2 * B_pad * out_pad * in_dim,
            bytes_accessed=(
                out_pad * in_dim * 2
                + B_pad * out_pad * out_itemsize
                + B_pad * in_dim * 4
            ),
            transcendentals=B_pad,
        ),
    )(x, w_eff)

    return out[:B, :out_dim]


def dino_head_reference_f32(x, weight_v, weight_g=None):
    """Pure-JAX f32 reference mirroring the PyTorch forward exactly."""
    x32 = x.astype(jnp.float32)
    w32 = weight_v.astype(jnp.float32)
    x_n = x32 / jnp.maximum(jnp.linalg.norm(x32, axis=-1, keepdims=True), 1e-12)
    g = 1.0 if weight_g is None else weight_g.reshape(-1, 1).astype(jnp.float32)
    w_n = w32 * (g / jnp.linalg.norm(w32, axis=-1, keepdims=True))
    return (x_n @ w_n.T) / 0.1


# TODO(synk): this module variant has no MLP trunk and weight_g is frozen at 1
# (norm_last_layer=True); pass weight_g to prepare_dino_head_params if trainable.


if __name__ == "__main__":
    key = jax.random.PRNGKey(0)
    k_x, k_w = jax.random.split(key)

    # Small shapes consistent with the module: bottleneck-style in_dim=256,
    # a small out_dim, batch 8.  block_n=128 exercises a 4-step weight stream.
    B, in_dim, out_dim = 8, 256, 512
    x = jax.random.normal(k_x, (B, in_dim), dtype=jnp.float32)
    bound = 1.0 / (in_dim ** 0.5)
    weight_v = jax.random.uniform(
        k_w, (out_dim, in_dim), jnp.float32, minval=-bound, maxval=bound
    )

    w_eff, out_dim_real = prepare_dino_head_params(weight_v)
    out = dino_head_forward(x, w_eff, out_dim=out_dim_real, block_n=128)
    out = jax.block_until_ready(out)
    assert out.shape == (B, out_dim)

    # (a) tight check vs a reference that emulates the kernel's bf16 rounding.
    x32 = x.astype(jnp.float32)
    inv_x = lax.rsqrt(
        jnp.maximum(jnp.sum(x32 * x32, axis=-1, keepdims=True), 1e-24)
    ) * 10.0
    x_bf = (x32 * inv_x).astype(jnp.bfloat16).astype(jnp.float32)
    ref_bf = x_bf @ w_eff[:out_dim].astype(jnp.float32).T
    assert jnp.allclose(out, ref_bf, atol=2e-3, rtol=2e-3), (
        "mismatch vs bf16-emulating reference"
    )

    # (b) loose check vs the exact f32 PyTorch semantics (bf16 weight tolerance).
    ref_f32 = dino_head_reference_f32(x, weight_v)
    assert jnp.allclose(out, ref_f32, atol=5e-2, rtol=5e-2), (
        "mismatch vs f32 reference"
    )

    print("KERNEL_OK")
</pallas_src>

<mosaic_0001>
module attributes {stable_mosaic.version = 11 : i64} {
  func.func @_dino_head_kernel(%arg0: i32, %arg1: i32, %arg2: memref<8x256xf32, #tpu.memory_space<vmem>>, %arg3: memref<128x256xbf16, #tpu.memory_space<vmem>>, %arg4: memref<8x128xf32, #tpu.memory_space<vmem>>, %arg5: memref<8x256xbf16, #tpu.memory_space<vmem>>) attributes {dimension_semantics = [#tpu.dimension_semantics<parallel>, #tpu.dimension_semantics<arbitrary>], iteration_bounds = array<i64: 4, 1>, scalar_prefetch = 0 : i64, scratch_operands = 1 : i64, tpu.core_type = #tpu.core_type<tc>, window_params = [{pipeline_mode = #tpu.pipeline_mode<synchronous>, transform_indices = @transform_0, window_bounds = array<i64: 8, 256>}, {transform_indices = @transform_1, window_bounds = array<i64: 128, 256>}, {transform_indices = @transform_2, window_bounds = array<i64: 8, 128>}]} {
    %c0_i32 = arith.constant 0 : i32
    %0 = arith.cmpi eq, %arg1, %c0_i32 : i32
    %1 = arith.extui %0 : i1 to i32
    %c0_i32_0 = arith.constant 0 : i32
    %2 = arith.cmpi ne, %1, %c0_i32_0 : i32
    scf.if %2 {
      %c0_5 = arith.constant 0 : index
      %c0_6 = arith.constant 0 : index
      %10 = vector.load %arg2[%c0_5, %c0_6] : memref<8x256xf32, #tpu.memory_space<vmem>>, vector<8x256xf32>
      %11 = arith.mulf %10, %10 : vector<8x256xf32>
      %cst_7 = arith.constant dense<0.000000e+00> : vector<8xf32>
      %12 = vector.multi_reduction <add>, %11, %cst_7 [1] : vector<8x256xf32> to vector<8xf32>
      %13 = vector.shape_cast %12 : vector<8xf32> to vector<8x1xf32>
      %cst_8 = arith.constant 1.000000e-24 : f32
      %14 = vector.broadcast %cst_8 : f32 to vector<8x1xf32>
      %15 = arith.maximumf %13, %14 : vector<8x1xf32>
      %16 = math.rsqrt %15 : vector<8x1xf32>
      %cst_9 = arith.constant 1.000000e+01 : f32
      %17 = vector.broadcast %cst_9 : f32 to vector<8x1xf32>
      %18 = arith.mulf %16, %17 : vector<8x1xf32>
      %19 = vector.broadcast %18 : vector<8x1xf32> to vector<8x256xf32>
      %20 = arith.mulf %10, %19 : vector<8x256xf32>
      %21 = arith.truncf %20 : vector<8x256xf32> to vector<8x256xbf16>
      %c0_10 = arith.constant 0 : index
      %c0_11 = arith.constant 0 : index
      %22 = vector.load %arg5[%c0_10, %c0_11] : memref<8x256xbf16, #tpu.memory_space<vmem>>, vector<8x256xbf16>
      tpu.vector_store %arg5[%c0_10, %c0_11], %21 {strides = array<i32>} : memref<8x256xbf16, #tpu.memory_space<vmem>>, vector<8x256xbf16>,
    } else {
    }
    %c8_i32 = arith.constant 8 : i32
    %3 = arith.muli %arg1, %c8_i32 : i32
    %4 = tpu.assume_multiple %3, 8 : i32
    %5 = arith.index_cast %4 : i32 to index
    %c0 = arith.constant 0 : index
    %6 = vector.load %arg5[%5, %c0] : memref<8x256xbf16, #tpu.memory_space<vmem>>, vector<8x256xbf16>
    %c0_1 = arith.constant 0 : index
    %c0_2 = arith.constant 0 : index
    %7 = vector.load %arg3[%c0_1, %c0_2] : memref<128x256xbf16, #tpu.memory_space<vmem>>, vector<128x256xbf16>
    %cst = arith.constant dense<0.000000e+00> : vector<8x128xf32>
    %8 = tpu.matmul %6, %7, %cst {dimension_numbers = #tpu.dot_dimension_numbers<[1], [1], [0], [0], [0, 0, 1, 0], [], []>} : vector<8x256xbf16>, vector<128x256xbf16>, vector<8x128xf32> -> vector<8x128xf32>
    %c0_3 = arith.constant 0 : index
    %c0_4 = arith.constant 0 : index
    %9 = vector.load %arg4[%c0_3, %c0_4] : memref<8x128xf32, #tpu.memory_space<vmem>>, vector<8x128xf32>
    tpu.vector_store %arg4[%c0_3, %c0_4], %8 {strides = array<i32>} : memref<8x128xf32, #tpu.memory_space<vmem>>, vector<8x128xf32>,
    return
  }
  func.func @transform_0(%arg0: i32, %arg1: i32) -> (i32, i32) {
    %c0_i32 = arith.constant 0 : i32
    %c0_i32_0 = arith.constant 0 : i32
    %c0_i32_1 = arith.constant 0 : i32
    return %c0_i32, %c0_i32_0 : i32, i32
  }
  func.func @transform_1(%arg0: i32, %arg1: i32) -> (i32, i32) {
    %c0_i32 = arith.constant 0 : i32
    %c0_i32_0 = arith.constant 0 : i32
    return %arg0, %c0_i32 : i32, i32
  }
  func.func @transform_2(%arg0: i32, %arg1: i32) -> (i32, i32) {
    %c0_i32 = arith.constant 0 : i32
    return %arg1, %arg0 : i32, i32
  }
}

</mosaic_0001>

<llo_original>
// kernel: dino_head_forward.1
$region0: #{dino_head_forward.1}
  #allocation0 [shape = 'u32[]', space=smem, size = 0x4, offset = 0x4, fixed_abs, tag = 'smem constant byte address 0x4 - core index']
  #allocation1 [shape = 'u32[144,128]{1,0:T(1,128)}', space=vmem, size = 0x12000, scoped, tag = 'internal scratch']
  #allocation2 [shape = 'bf16[8,256]{1,0:T(8,128)(2,1)}', space=vmem, size = 0x1000, scoped, tag = 'scratch operand']
  %s0 = inlined_call_operand.hbm [shape: f32[8,256], index: 0, kind: input, shape index: {}]
  %s1 = inlined_call_operand.hbm [shape: bf16[512,256], index: 1, kind: input, shape index: {}]
  %s2 = inlined_call_operand.hbm [shape: f32[8,512], index: 2, kind: output, shape index: {}]
  %s3 = sld [smem:[#allocation0]]
  $region53: #{dino_head_forward.1} parent=0
    _
  %s5 = ssub.s32 1, %s3
  %s6 = scalar_select 0, %s5, %s3
  $region1: #{dino_head_forward.1} parent=0
    #allocation3 [shape = 'u8[8192]{0}', space=vmem, size = 0x2000, scoped, tag = 'input window, operand 0, single buffered']
    #allocation4 [shape = 's32[2]{0}', space=sflag, size = 0x8, scoped, tag = 'scoped memory for dino_head_forward.1']
    #allocation5 [shape = 's32[2]{0}', space=sflag, size = 0x8, scoped, tag = 'scoped memory for dino_head_forward.1']
    #allocation6 [shape = 'u8[131072]{0}', space=vmem, size = 0x20000, scoped, tag = 'input window, operand 1']
    #allocation7 [shape = 's32[2]{0}', space=sflag, size = 0x8, scoped, tag = 'scoped memory for dino_head_forward.1']
    #allocation8 [shape = 'u8[8192]{0}', space=vmem, size = 0x2000, scoped, tag = 'output window, operand 0']
    %7 = vsyncpa [#allocation4], 0
    %8 = vsyncpa [#allocation7], 0
    %s9 = scalar_lea.sflag [#allocation7], 1
    %10 = vsyncpa %s9, 0
    %11 = vsyncpa [#allocation5], 0
    %s12 = scalar_lea.sflag [#allocation5], 1
    %13 = vsyncpa %s12, 0
    loop: start=0, step=1, limit=6
    $region2: #{dino_head_forward.1} parent=1 // loop_pre_header
      _
    $region3: #{dino_head_forward.1} parent=1 // loop_header
      %s15 = sphi 0, %s19
      %p16 = scmp.ge.s32.totalorder %s15, 6
      %s22 = sphi 0, %s34
      %s23 = sphi 0, %s30
      %s24 = sphi 0, %s22
      %s25 = sphi 0, %s23
      %s26 = sphi 0, %s24
      %s27 = sphi 0, %s25
      %s35 = sphi 0, %s35
      %s37 = sphi 0, %s35
      %s38 = sphi 0, %s37
      %s52 = sphi 0, %s38
      %s58 = sphi 0, %s60
      %s61 = sphi 0, %s58
      %s62 = sphi 0, %s61
      %s78 = sphi 0, %s62
      %s86 = sphi 0, %s88
      %s89 = sphi 0, %s86
      %s90 = sphi 0, %s89
      %s106 = sphi 0, %s90
    $region4: #{dino_head_forward.1} parent=1 // loop_header_branch
      %18 = sbr.rel (%p16) target = $region8
    $region5: #{dino_head_forward.1} parent=1 // loop_body
      %s20 = ssub.s32 %s15, 1
      %s21 = ssub.s32 %s15, 2
      %s28 = sadd.s32 1, %s23
      %p29 = scmp.ge.s32.totalorder %s28, 1
      %s30 = scalar_select %p29, 0, %s28
      %s31 = sadd.s32 1, %s22
      %s32 = scalar_select %p29, %s31, %s22
      %p33 = scmp.ge.s32.totalorder %s32, 4
      %s34 = scalar_select %p33, 0, %s32
      %s36 = sadd.s32 %s35, 1
      %p39 = scmp.eq.s32.totalorder %s15, 3
      %p40 = scmp.ne.s32.totalorder %s35, %s37
      %p41 = scmp.eq.s32.totalorder %s15, 0
      %p42 = por %p40, %p41
      %p43 = scmp.ne.s32.totalorder %s35, %s37
      %p44 = scmp.eq.s32.totalorder %s20, 3
      %p45 = por %p43, %p44
      %p46 = scmp.ne.s32.totalorder %s37, %s38
      %p47 = scmp.eq.s32.totalorder %s20, 0
      %p48 = por %p46, %p47
      %p49 = scmp.ne.s32.totalorder %s37, %s38
      %p50 = scmp.eq.s32.totalorder %s21, 3
      %p51 = por %p49, %p50
      %p53 = scmp.ne.s32.totalorder %s38, %s52
      %p54 = scmp.eq.s32.totalorder %s21, 0
      %p55 = por %p53, %p54
      %s56 = ssub.s32 %s22, %s34
      %p57 = scmp.eq.s32.totalorder %s56, 0
      %s59 = sadd.s32 %s58, 1
      %s60 = scalar_select %p57, %s58, %s59
      %p63 = pneg %p57
      %p64 = scmp.eq.s32.totalorder %s15, 3
      %p65 = por %p63, %p64
      %p66 = scmp.ne.s32.totalorder %s58, %s61
      %p67 = scmp.eq.s32.totalorder %s15, 0
      %p68 = por %p66, %p67
      %p69 = scmp.ne.s32.totalorder %s58, %s61
      %p70 = scmp.eq.s32.totalorder %s20, 3
      %p71 = por %p69, %p70
      %p72 = scmp.ne.s32.totalorder %s61, %s62
      %p73 = scmp.eq.s32.totalorder %s20, 0
      %p74 = por %p72, %p73
      %p75 = scmp.ne.s32.totalorder %s61, %s62
      %p76 = scmp.eq.s32.totalorder %s21, 3
      %p77 = por %p75, %p76
      %p79 = scmp.ne.s32.totalorder %s62, %s78
      %p80 = scmp.eq.s32.totalorder %s21, 0
      %p81 = por %p79, %p80
      %s82 = ssub.s32 %s23, %s30
      %s83 = ssub.s32 %s22, %s34
      %s84 = sor.u32 %s82, %s83
      %p85 = scmp.eq.s32.totalorder %s84, 0
      %s87 = sadd.s32 %s86, 1
      %s88 = scalar_select %p85, %s86, %s87
      %p91 = pneg %p85
      %p92 = scmp.eq.s32.totalorder %s15, 3
      %p93 = por %p91, %p92
      %p94 = scmp.ne.s32.totalorder %s86, %s89
      %p95 = scmp.eq.s32.totalorder %s15, 0
      %p96 = por %p94, %p95
      %p97 = scmp.ne.s32.totalorder %s86, %s89
      %p98 = scmp.eq.s32.totalorder %s20, 3
      %p99 = por %p97, %p98
      %p100 = scmp.ne.s32.totalorder %s89, %s90
      %p101 = scmp.eq.s32.totalorder %s20, 0
      %p102 = por %p100, %p101
      %p103 = scmp.ne.s32.totalorder %s89, %s90
      %p104 = scmp.eq.s32.totalorder %s21, 3
      %p105 = por %p103, %p104
      %p107 = scmp.ne.s32.totalorder %s90, %s106
      %p108 = scmp.eq.s32.totalorder %s21, 0
      %p109 = por %p107, %p108
      %p110 = scmp.le.s32.totalorder 1, %s15
      %p111 = scmp.lt.s32.totalorder %s15, 5
      %p112 = pnand %p110, %p111
      %p113 = pneg %p112
      // Predicated region
      $region9: #{dino_head_forward.1} parent=5 // pred_check
        _
      $region10: #{dino_head_forward.1} parent=5 // pred_check_branch
        %115 = sbr.rel (%p112) target = $region12
      $region11: #{dino_head_forward.1} parent=5 // pred_region
        %s116 = ssub.s32 %s15, 1
        // Predicated region
        $region13: #{dino_head_forward.1} parent=11 // pred_check
          %p117 = pneg %p48
        $region14: #{dino_head_forward.1} parent=11 // pred_check_branch
          %119 = sbr.rel (%p117) target = $region16
        $region15: #{dino_head_forward.1} parent=11 // pred_region
          %s121 = ssub.s32 256, 256
          %122 = vsyncadd [#allocation4], %s121
          %s124 = sshll.u32 [#allocation3], 4
          %s125 = int_to_ptr.vmem [resolvable:$true] %s124
          %127 = dma.hbm_to_vmem [thread:$0]  %s0, 256, %s125, [#allocation4]
        $region16: #{dino_head_forward.1} parent=11 // pred_fallthru
          _
      $region12: #{dino_head_forward.1} parent=5 // pred_fallthru
        _
      %p128 = scmp.lt.s32.totalorder %s15, 4
      // Predicated region
      $region17: #{dino_head_forward.1} parent=5 // pred_check
        %p129 = pneg %p128
      $region18: #{dino_head_forward.1} parent=5 // pred_check_branch
        %131 = sbr.rel (%p129) target = $region20
      $region19: #{dino_head_forward.1} parent=5 // pred_region
        // Predicated region
        $region21: #{dino_head_forward.1} parent=19 // pred_check
          %p132 = pneg %p68
        $region22: #{dino_head_forward.1} parent=19 // pred_check_branch
          %134 = sbr.rel (%p132) target = $region24
        $region23: #{dino_head_forward.1} parent=19 // pred_region
          %s135 = sand.u32 %s58, 1
          %s136 = scalar_lea.sflag [#allocation7], %s135
          %s137 = sand.u32 %s58, 1
          %s138 = smul.addr %s137, 128
          %s139 = scalar_lea.vmem [#allocation6], %s138
          %s140 = smul.u32 16, %s22
          %s142 = ssub.s32 2048, 2048
          %143 = vsyncadd %s136, %s142
          %s144 = smul.addr %s140, 2
          %s145 = smul.addr %s144, 64
          %s146 = scalar_lea.hbm %s1, %s145
          %s147 = sshll.u32 %s139, 4
          %s148 = int_to_ptr.vmem [resolvable:$true] %s147
          %153 = dma.hbm_to_vmem [thread:$0]  %s146, 2048, %s148, %s136, 128, 128, 8
        $region24: #{dino_head_forward.1} parent=19 // pred_fallthru
          _
      $region20: #{dino_head_forward.1} parent=5 // pred_fallthru
        _
      %p154 = scmp.le.s32.totalorder 1, %s15
      %p155 = scmp.lt.s32.totalorder %s15, 5
      %p156 = pnand %p154, %p155
      %p157 = pneg %p156
      // Predicated region
      $region25: #{dino_head_forward.1} parent=5 // pred_check
        _
      $region26: #{dino_head_forward.1} parent=5 // pred_check_branch
        %159 = sbr.rel (%p156) target = $region28
      $region27: #{dino_head_forward.1} parent=5 // pred_region
        %s160 = ssub.s32 %s15, 1
        // Predicated region
        $region29: #{dino_head_forward.1} parent=27 // pred_check
          %p161 = pneg %p48
        $region30: #{dino_head_forward.1} parent=27 // pred_check_branch
          %163 = sbr.rel (%p161) target = $region32
        $region31: #{dino_head_forward.1} parent=27 // pred_region
          %164 = dma.done [#allocation4], 256
        $region32: #{dino_head_forward.1} parent=27 // pred_fallthru
          _
        %s165 = sand.u32 %s61, 1
        %s166 = scalar_lea.sflag [#allocation7], %s165
        %s167 = sand.u32 %s61, 1
        %s168 = smul.addr %s167, 128
        %s169 = scalar_lea.vmem [#allocation6], %s168
        // Predicated region
        $region33: #{dino_head_forward.1} parent=27 // pred_check
          %p170 = pneg %p74
        $region34: #{dino_head_forward.1} parent=27 // pred_check_branch
          %172 = sbr.rel (%p170) target = $region36
        $region35: #{dino_head_forward.1} parent=27 // pred_region
          %173 = dma.done %s166, 2048
        $region36: #{dino_head_forward.1} parent=27 // pred_fallthru
          _
        %p174 = pneg %p48
        %p175 = pneg %p45
        %s176 = sand.u32 %s61, 1
        %s177 = scalar_lea.sflag [#allocation7], %s176
        %s178 = sand.u32 %s61, 1
        %s179 = smul.addr %s178, 128
        %s180 = scalar_lea.vmem [#allocation6], %s179
        %p181 = pneg %p74
        %p182 = pneg %p71
        %p183 = pneg %p102
        %p184 = pneg %p99
        %s185 = sand.u32 %s89, 1
        %s186 = scalar_lea.sflag [#allocation5], %s185
        %s187 = sand.u32 %s89, 1
        %s188 = smul.addr %s187, 8
        %s189 = scalar_lea.vmem [#allocation8], %s188
        %s190 = smul.u32 16, %s24
        %p192 = scmp.eq.s32.totalorder %s25, 0
        // Predicated region
        $region37: #{dino_head_forward.1} parent=27 // pred_check
          %p193 = pneg %p192
        $region38: #{dino_head_forward.1} parent=27 // pred_check_branch
          %195 = sbr.rel (%p193) target = $region40
        $region39: #{dino_head_forward.1} parent=27 // pred_region
          %v196 = vld [vmem:[#allocation3] sm:$0xff]
          %v197 = vld [vmem:[#allocation3 + $0x8] sm:$0xff]
          %v198 = vmul.f32 %v196, %v196
          %v199 = vmul.f32 %v197, %v197
          %v200 = vadd.f32 %v198, %v199
          %201 = vadd.xlane.f32.xlu0 %v200
          %v202 = vpop.xlane.xlu0 %201
          %v203 = vmax.f32 %v202, 1e-24
          %v204 = vrsqrt.pop %v203
          %v205 = vmul.f32 %v204, 10.0
          %v206 = vmul.f32 %v196, %v205
          %v207 = vmul.f32 %v197, %v205
          %v208 = vpack.c.bf16 %v206, %v206
          %v209 = vpack.c.bf16 %v207, %v207
          %v212 = vunpack.c.l.b16 %v208
          %v213 = vunpack.c.l.b16 %v209
          %v214 = vpack.c.b16 %v213, %v212
          %216 = vst [vmem:[#allocation2] sm:$0xff] %v214
        $region40: #{dino_head_forward.1} parent=27 // pred_fallthru
          _
        %s217 = smul.u32 %s25, 8
        %s218 = sshra.s32 %s217, 3
        %s219 = sand.u32 %s217, 7
        %s220 = smul.u32 %s218, 2
        %s221 = smul.addr %s220, 4
        %s222 = scalar_lea.vmem [#allocation2], %s221
        %v223 = vld [vmem:[%s222] sm:$0xff]
        %v224 = vld [vmem:[%s169] sm:$0xff]
        %v225 = vld [vmem:[%s169 + $0x8] sm:$0xff]
        %v226 = vld [vmem:[%s169 + $0x10] sm:$0xff]
        %v227 = vld [vmem:[%s169 + $0x18] sm:$0xff]
        %v228 = vld [vmem:[%s169 + $0x20] sm:$0xff]
        %v229 = vld [vmem:[%s169 + $0x28] sm:$0xff]
        %v230 = vld [vmem:[%s169 + $0x30] sm:$0xff]
        %v231 = vld [vmem:[%s169 + $0x38] sm:$0xff]
        %v232 = vld [vmem:[%s169 + $0x40] sm:$0xff]
        %v233 = vld [vmem:[%s169 + $0x48] sm:$0xff]
        %v234 = vld [vmem:[%s169 + $0x50] sm:$0xff]
        %v235 = vld [vmem:[%s169 + $0x58] sm:$0xff]
        %v236 = vld [vmem:[%s169 + $0x60] sm:$0xff]
        %v237 = vld [vmem:[%s169 + $0x68] sm:$0xff]
        %v238 = vld [vmem:[%s169 + $0x70] sm:$0xff]
        %v239 = vld [vmem:[%s169 + $0x78] sm:$0xff]
        %v241 = vunpack.c.l.b16 %v223
        %v242 = vunpack.c.h.b16 %v223
        %v243 = vpack.c.b16 %v241, %v241
        %v244 = vpack.c.b16 %v242, %v242
        %v263 = vunpack.c.l.b16 %v224
        %v264 = vunpack.c.h.b16 %v224
        %v265 = vunpack.c.l.b16 %v225
        %v266 = vunpack.c.h.b16 %v225
        %v267 = vunpack.c.l.b16 %v226
        %v268 = vunpack.c.h.b16 %v226
        %v269 = vunpack.c.l.b16 %v227
        %v270 = vunpack.c.h.b16 %v227
        %v271 = vunpack.c.l.b16 %v228
        %v272 = vunpack.c.h.b16 %v228
        %v273 = vunpack.c.l.b16 %v229
        %v274 = vunpack.c.h.b16 %v229
        %v275 = vunpack.c.l.b16 %v230
        %v276 = vunpack.c.h.b16 %v230
        %v277 = vunpack.c.l.b16 %v231
        %v278 = vunpack.c.h.b16 %v231
        %v279 = vunpack.c.l.b16 %v232
        %v280 = vunpack.c.h.b16 %v232
        %v281 = vunpack.c.l.b16 %v233
        %v282 = vunpack.c.h.b16 %v233
        %v283 = vunpack.c.l.b16 %v234
        %v284 = vunpack.c.h.b16 %v234
        %v285 = vunpack.c.l.b16 %v235
        %v286 = vunpack.c.h.b16 %v235
        %v287 = vunpack.c.l.b16 %v236
        %v288 = vunpack.c.h.b16 %v236
        %v289 = vunpack.c.l.b16 %v237
        %v290 = vunpack.c.h.b16 %v237
        %v291 = vunpack.c.l.b16 %v238
        %v292 = vunpack.c.h.b16 %v238
        %v293 = vunpack.c.l.b16 %v239
        %v294 = vunpack.c.h.b16 %v239
        %v295 = vpack.c.b16 %v265, %v263
        %v296 = vpack.c.b16 %v266, %v264
        %v297 = vpack.c.b16 %v269, %v267
        %v298 = vpack.c.b16 %v270, %v268
        %v299 = vpack.c.b16 %v273, %v271
        %v300 = vpack.c.b16 %v274, %v272
        %v301 = vpack.c.b16 %v277, %v275
        %v302 = vpack.c.b16 %v278, %v276
        %v303 = vpack.c.b16 %v281, %v279
        %v304 = vpack.c.b16 %v282, %v280
        %v305 = vpack.c.b16 %v285, %v283
        %v306 = vpack.c.b16 %v286, %v284
        %v307 = vpack.c.b16 %v289, %v287
        %v308 = vpack.c.b16 %v290, %v288
        %v309 = vpack.c.b16 %v293, %v291
        %v310 = vpack.c.b16 %v294, %v292
        %327 = vmatprep.subr.bf16.mxu0 %v310
        %328 = vmatpush1.bf16.xpose.msra.mxu0 %v309
        %329 = vmatprep.subr.bf16.mxu0 %v308
        %330 = vmatpush1.bf16.xpose.msra.mxu0 %v307
        %331 = vmatprep.subr.bf16.mxu0 %v306
        %332 = vmatpush1.bf16.xpose.msra.mxu0 %v305
        %333 = vmatprep.subr.bf16.mxu0 %v304
        %334 = vmatpush1.bf16.xpose.msra.mxu0 %v303
        %335 = vmatprep.subr.bf16.mxu0 %v302
        %336 = vmatpush1.bf16.xpose.msra.mxu0 %v301
        %337 = vmatprep.subr.bf16.mxu0 %v300
        %338 = vmatpush1.bf16.xpose.msra.mxu0 %v299
        %339 = vmatprep.subr.bf16.mxu0 %v298
        %340 = vmatpush1.bf16.xpose.msra.mxu0 %v297
        %341 = vmatprep.subr.bf16.mxu0 %v296
        %342 = vmatpush1.bf16.xpose.msra.mxu0 %v295
        %343 = vmatprep.subr.bf16.mxu0 0
        %344 = vmatpush2.bf16.xpose.msra.mxu0 0
        %345 = vmatprep.subr.bf16.mxu0 0
        %346 = vmatpush2.bf16.xpose.msra.mxu0 0
        %347 = vmatprep.subr.bf16.mxu0 0
        %348 = vmatpush2.bf16.xpose.msra.mxu0 0
        %349 = vmatprep.subr.bf16.mxu0 0
        %350 = vmatpush2.bf16.xpose.msra.mxu0 0
        %351 = vmatprep.subr.bf16.mxu0 0
        %352 = vmatpush2.bf16.xpose.msra.mxu0 0
        %353 = vmatprep.subr.bf16.mxu0 0
        %354 = vmatpush2.bf16.xpose.msra.mxu0 0
        %355 = vmatprep.subr.bf16.mxu0 0
        %356 = vmatpush2.bf16.xpose.msra.mxu0 0
        %357 = vmatprep.subr.bf16.mxu0 0
        %358 = vmatpush2.bf16.xpose.msra.mxu0 0
        %359 = vmatprep.mubr.bf16.mxu0 %v244
        %360 = vmatmul.mubr.bf16.gmra.mxu0 %v243
        %v361 = vpop.f32.mrf.mxu0
        %v362 = vadd.f32 0.0, %v361
        %v363 = vpop.f32.mrf.mxu0
        %v364 = vpop.f32.mrf.mxu0
        %v365 = vpop.f32.mrf.mxu0
        %366 = vdwg.mxu0
        %367 = vst [vmem:[%s189] sm:$0xff] %v362
        %s368 = sand.u32 %s89, 1
        %s369 = scalar_lea.sflag [#allocation5], %s368
        %s370 = sand.u32 %s89, 1
        %s371 = smul.addr %s370, 8
        %s372 = scalar_lea.vmem [#allocation8], %s371
        // Predicated region
        $region41: #{dino_head_forward.1} parent=27 // pred_check
          %p373 = pneg %p99
        $region42: #{dino_head_forward.1} parent=27 // pred_check_branch
          %375 = sbr.rel (%p373) target = $region44
        $region43: #{dino_head_forward.1} parent=27 // pred_region
          %s377 = ssub.s32 128, 128
          %378 = vsyncadd %s369, %s377
          %s379 = smul.addr %s25, 4
          %s380 = sadd.s32 %s24, %s379
          %s381 = smul.addr %s380, 128
          %s382 = scalar_lea.hbm %s2, %s381
          %s384 = sshll.u32 %s372, 4
          %s385 = int_to_ptr.vmem [resolvable:$true] %s384
          %387 = dma.vmem_to_hbm [thread:$0]  %s385, 128, %s382, %s369
        $region44: #{dino_head_forward.1} parent=27 // pred_fallthru
          _
      $region28: #{dino_head_forward.1} parent=5 // pred_fallthru
        _
      %p388 = scmp.le.s32.totalorder 2, %s15
      // Predicated region
      $region45: #{dino_head_forward.1} parent=5 // pred_check
        %p389 = pneg %p388
      $region46: #{dino_head_forward.1} parent=5 // pred_check_branch
        %391 = sbr.rel (%p389) target = $region48
      $region47: #{dino_head_forward.1} parent=5 // pred_region
        %s392 = ssub.s32 %s15, 2
        // Predicated region
        $region49: #{dino_head_forward.1} parent=47 // pred_check
          %p393 = pneg %p105
        $region50: #{dino_head_forward.1} parent=47 // pred_check_branch
          %395 = sbr.rel (%p393) target = $region52
        $region51: #{dino_head_forward.1} parent=47 // pred_region
          %s396 = sand.u32 %s90, 1
          %s397 = scalar_lea.sflag [#allocation5], %s396
          %s398 = sand.u32 %s90, 1
          %s399 = smul.addr %s398, 8
          %s400 = scalar_lea.vmem [#allocation8], %s399
          %401 = dma.done %s397, 128
        $region52: #{dino_head_forward.1} parent=47 // pred_fallthru
          _
      $region48: #{dino_head_forward.1} parent=5 // pred_fallthru
        _
    $region6: #{dino_head_forward.1} parent=1 // loop_footer
      %s19 = sadd.s32 1, %s15
    $region7: #{dino_head_forward.1} parent=1 // loop_footer_branch
      %14 = sbr.rel target = $region3
    $region8: #{dino_head_forward.1} parent=1 // loop_exit
      _
    %402 = vsyncpa [#allocation4], 1
    %s403 = scalar_lea.sflag [#allocation4], 1
    %404 = vsyncpa %s403, 1
    %405 = vsyncpa [#allocation7], 1
    %s406 = scalar_lea.sflag [#allocation7], 1
    %407 = vsyncpa %s406, 1
    %408 = vsyncpa [#allocation5], 1
    %s409 = scalar_lea.sflag [#allocation5], 1
    %410 = vsyncpa %s409, 1

</llo_original>
